<compile_context>
chip_gen: v6e
topology: v6e:2x2x1
jax: 0.10.0
libtpu: 0.0.40
codegen_flags: <defaults>
</compile_context>

<pallas_src>
import numpy as np
import jax
import jax.numpy as jnp
from jax import lax
from jax.experimental import pallas as pl
from jax.experimental.pallas import tpu as pltpu

LEAKY_SLOPE = 0.02
BN_EPS = 1e-5

# Architecture constants for linearSize=6.
H0, W0 = 6, 6          # input spatial
H1, W1_ = 3, 3         # spatial after first AvgPool2d(2)
C1, C2 = 4, 8          # conv channel counts
IN_FEAT = H0 * W0      # 36
F1 = C1 * H0 * W0      # 144
F2 = C2 * H1 * W1_     # 72


def _leaky(v):
    return jnp.where(v > 0, v, LEAKY_SLOPE * v)


# ------------- structural constants (shape-only, built once at import) ------ #
def _conv3x3_tap_select(h, w):
    """S[p, k, q] = 1 if output position p reads input position q via tap k (pad=1)."""
    s = np.zeros((h * w, 9, h * w), np.float32)
    for y in range(h):
        for x in range(w):
            p = y * w + x
            for ky in range(3):
                for kx in range(3):
                    sy, sx = y + ky - 1, x + kx - 1
                    if 0 <= sy < h and 0 <= sx < w:
                        s[p, ky * 3 + kx, sy * w + sx] = 1.0
    return s


def _avgpool2_spatial(h, w):
    """AvgPool2d(2) (stride 2, floor) as a (ho*wo, h*w) matrix for one channel."""
    ho, wo = h // 2, w // 2
    p = np.zeros((ho * wo, h * w), np.float32)
    for py in range(ho):
        for px in range(wo):
            r = py * wo + px
            for dy in range(2):
                for dx in range(2):
                    p[r, (2 * py + dy) * w + (2 * px + dx)] = 0.25
    return p


_S1 = _conv3x3_tap_select(H0, W0)                                          # (36, 9, 36)
_S2 = _conv3x3_tap_select(H1, W1_)                                         # (9, 9, 9)
_P1 = np.kron(np.eye(C1, dtype=np.float32), _avgpool2_spatial(H0, W0))     # (36, 144)
_P2 = np.kron(np.eye(C2, dtype=np.float32), _avgpool2_spatial(H1, W1_))    # (8, 72)


# ----------------------------- Pallas kernel ------------------------------- #
def simple_disc_kernel(x_ref, a1_ref, b1_ref, a2_ref, b2_ref, w3_ref, b3_ref,
                       out_ref):
    f32 = jnp.float32
    x = x_ref[...]                                                   # (36, NB), batch on lanes

    # block0: Conv2d(1,4,3,1,1) + bias + LeakyReLU as one (144,36)@(36,NB) matmul.
    h1 = _leaky(jnp.dot(a1_ref[...], x, preferred_element_type=f32) + b1_ref[...])

    # BatchNorm2d(eval) + Dropout2d(eval) + AvgPool2d(2) + Conv2d(4,8,3,1,1) all
    # folded on the host into a2/b2 -> one (72,144)@(144,NB) matmul + LeakyReLU.
    h2 = _leaky(jnp.dot(a2_ref[...], h1, preferred_element_type=f32) + b2_ref[...])

    # head: AvgPool2d(2) + Flatten + Linear(8,1) folded -> one (1,72)@(72,NB) matmul.
    out = jnp.dot(w3_ref[...], h2, preferred_element_type=f32) + b3_ref[...]
    out_ref[...] = _leaky(out)                                       # (1, NB) lane-dense


# ------------------------------ JAX glue ----------------------------------- #
def _prep_params(params):
    """Fold convs / BN / pools / linear into small O(1) constant matrices."""
    (w1, b1, gamma, beta, rmean, rvar, w2, b2, w3, b3) = [
        jnp.asarray(p, jnp.float32) for p in params]

    # Conv1 as a per-sample linear map, rows ordered (channel-major) c*36 + p.
    a1 = jnp.einsum('ck,pkq->cpq', w1.reshape(C1, 9),
                    jnp.asarray(_S1)).reshape(F1, IN_FEAT)           # (144, 36)
    b1c = jnp.repeat(b1, H0 * W0).reshape(F1, 1)

    # BatchNorm2d eval affine per h1 row (applied AFTER the first LeakyReLU).
    scale = gamma / jnp.sqrt(rvar + BN_EPS)
    shift = beta - rmean * scale
    bns = jnp.repeat(scale, H0 * W0)                                 # (144,)
    bnb = jnp.repeat(shift, H0 * W0).reshape(F1, 1)                  # (144, 1)

    # Conv2 (rows c_out*9 + p) composed with the preceding AvgPool2d(2), then
    # the BN affine folded in exactly:  A2P1 @ (bns*h + bnb) + b2
    #   = (A2P1 * bns^T) @ h + (A2P1 @ bnb + b2).
    a2 = jnp.einsum('oik,pkq->opiq', w2.reshape(C2, C1, 9),
                    jnp.asarray(_S2)).reshape(F2, C1 * H1 * W1_)     # (72, 36)
    a2p1 = a2 @ jnp.asarray(_P1)                                     # (72, 144)
    b2c = jnp.repeat(b2, H1 * W1_).reshape(F2, 1)                    # (72, 1)
    a2f = a2p1 * bns[None, :]                                        # (72, 144)
    b2f = a2p1 @ bnb + b2c                                           # (72, 1)

    # Final AvgPool2d(2) (3->1) + Flatten + Linear(8,1) composed.
    w3p2 = w3 @ jnp.asarray(_P2)                                     # (1, 72)
    b3c = b3.reshape(1, 1)
    return a1, b1c, a2f, b2f, w3p2, b3c


def simple_disc_pallas(x, params, block_n=1024):
    """x: (N, 1, 6, 6) float32 (NCHW).  Returns (N, 1)."""
    n = x.shape[0]
    consts = _prep_params(params)
    x_flat = jnp.asarray(x, jnp.float32).reshape(n, IN_FEAT).T       # (36, N), batch on lanes

    assert block_n % 128 == 0, "batch block must be lane-aligned (multiple of 128)"
    if n <= block_n:
        nb = ((n + 127) // 128) * 128                                # one lane-aligned tile
    else:
        nb = block_n
    npad = ((n + nb - 1) // nb) * nb
    if npad != n:
        x_flat = jnp.pad(x_flat, ((0, 0), (0, npad - n)))

    grid = (npad // nb,)

    def _const_spec(shape):
        return pl.BlockSpec(shape, lambda i: (0, 0))

    out = pl.pallas_call(
        simple_disc_kernel,
        out_shape=jax.ShapeDtypeStruct((1, npad), jnp.float32),
        grid=grid,
        in_specs=[
            pl.BlockSpec((IN_FEAT, nb), lambda i: (0, i)),           # x tile (batch on lanes)
            _const_spec((F1, IN_FEAT)),                              # a1            (144, 36)
            _const_spec((F1, 1)),                                    # b1            (144, 1)
            _const_spec((F2, F1)),                                   # BN+pool+conv2 (72, 144)
            _const_spec((F2, 1)),                                    # fused bias    (72, 1)
            _const_spec((1, F2)),                                    # pool+linear   (1, 72)
            _const_spec((1, 1)),                                     # b3
        ],
        out_specs=pl.BlockSpec((1, nb), lambda i: (0, i)),
        compiler_params=pltpu.CompilerParams(
            dimension_semantics=("parallel",),
            vmem_limit_bytes=32 * 1024 * 1024),
    )(x_flat, *consts)

    return out[:, :n].T                                              # (N, 1)


# --------------------------- pure-JAX reference ----------------------------- #
def simple_disc_ref(x, params):
    w1, b1, gamma, beta, rmean, rvar, w2, b2, w3, b3 = params
    dn = ("NCHW", "OIHW", "NCHW")
    h = lax.conv_general_dilated(x, w1, (1, 1), ((1, 1), (1, 1)),
                                 dimension_numbers=dn) + b1[None, :, None, None]
    h = _leaky(h)
    scale = gamma / jnp.sqrt(rvar + BN_EPS)
    shift = beta - rmean * scale
    h = h * scale[None, :, None, None] + shift[None, :, None, None]
    n, c, _, _ = h.shape
    h = h.reshape(n, c, 3, 2, 3, 2).mean(axis=(3, 5))                # AvgPool2d(2), 6->3
    h = lax.conv_general_dilated(h, w2, (1, 1), ((1, 1), (1, 1)),
                                 dimension_numbers=dn) + b2[None, :, None, None]
    h = _leaky(h)
    h = h[:, :, 0:2, 0:2].mean(axis=(2, 3))                          # AvgPool2d(2), 3->1 + flatten
    return _leaky(h @ w3.T + b3)


# ---------------------------------- main ------------------------------------ #
if __name__ == "__main__":
    key = jax.random.PRNGKey(0)
    ks = jax.random.split(key, 12)

    # Deterministic synthetic parameters (shapes from SimpleDisc.__init__).
    w1 = 0.1 * jax.random.normal(ks[1], (C1, 1, 3, 3), jnp.float32)
    b1 = 0.1 * jax.random.normal(ks[2], (C1,), jnp.float32)
    gamma = 1.0 + 0.1 * jax.random.normal(ks[3], (C1,), jnp.float32)
    beta = 0.1 * jax.random.normal(ks[4], (C1,), jnp.float32)
    rmean = 0.1 * jax.random.normal(ks[5], (C1,), jnp.float32)
    rvar = 1.0 + 0.1 * jnp.abs(jax.random.normal(ks[6], (C1,), jnp.float32))
    w2 = 0.1 * jax.random.normal(ks[7], (C2, C1, 3, 3), jnp.float32)
    b2 = 0.1 * jax.random.normal(ks[8], (C2,), jnp.float32)
    w3 = 0.1 * jax.random.normal(ks[9], (1, C2), jnp.float32)
    b3 = 0.1 * jax.random.normal(ks[10], (1,), jnp.float32)
    params = (w1, b1, gamma, beta, rmean, rvar, w2, b2, w3, b3)

    # Small batch (single lane-aligned grid step).
    N = 2
    x = jax.random.normal(ks[0], (N, 1, 6, 6), jnp.float32)
    out = jax.block_until_ready(simple_disc_pallas(x, params))
    ref = jax.block_until_ready(simple_disc_ref(x, params))
    np.testing.assert_allclose(np.asarray(out), np.asarray(ref), atol=1e-4, rtol=1e-4)

    # Larger, non-multiple batch exercising the parallel grid + lane padding path.
    N2 = 260
    x2 = jax.random.normal(ks[11], (N2, 1, 6, 6), jnp.float32)
    out2 = jax.block_until_ready(simple_disc_pallas(x2, params, block_n=128))
    ref2 = jax.block_until_ready(simple_disc_ref(x2, params))
    np.testing.assert_allclose(np.asarray(out2), np.asarray(ref2), atol=1e-4, rtol=1e-4)

    print("KERNEL_OK")
</pallas_src>

<mosaic_0001>
module attributes {stable_mosaic.version = 11 : i64} {
  func.func @simple_disc_kernel(%arg0: i32, %arg1: memref<36x128xf32, #tpu.memory_space<vmem>>, %arg2: memref<144x36xf32, #tpu.memory_space<vmem>>, %arg3: memref<144x1xf32, #tpu.memory_space<vmem>>, %arg4: memref<72x144xf32, #tpu.memory_space<vmem>>, %arg5: memref<72x1xf32, #tpu.memory_space<vmem>>, %arg6: memref<1x72xf32, #tpu.memory_space<vmem>>, %arg7: memref<1x1xf32, #tpu.memory_space<vmem>>, %arg8: memref<1x128xf32, #tpu.memory_space<vmem>>) attributes {dimension_semantics = [#tpu.dimension_semantics<parallel>], iteration_bounds = array<i64: 1>, scalar_prefetch = 0 : i64, scratch_operands = 0 : i64, tpu.core_type = #tpu.core_type<tc>, window_params = [{transform_indices = @transform_0, window_bounds = array<i64: 36, 128>}, {pipeline_mode = #tpu.pipeline_mode<synchronous>, transform_indices = @transform_1, window_bounds = array<i64: 144, 36>}, {pipeline_mode = #tpu.pipeline_mode<synchronous>, transform_indices = @transform_2, window_bounds = array<i64: 144, 1>}, {pipeline_mode = #tpu.pipeline_mode<synchronous>, transform_indices = @transform_3, window_bounds = array<i64: 72, 144>}, {pipeline_mode = #tpu.pipeline_mode<synchronous>, transform_indices = @transform_4, window_bounds = array<i64: 72, 1>}, {pipeline_mode = #tpu.pipeline_mode<synchronous>, transform_indices = @transform_5, window_bounds = array<i64: 1, 72>}, {pipeline_mode = #tpu.pipeline_mode<synchronous>, transform_indices = @transform_6, window_bounds = array<i64: 1, 1>}, {transform_indices = @transform_7, window_bounds = array<i64: 1, 128>}]} {
    %c0 = arith.constant 0 : index
    %c0_0 = arith.constant 0 : index
    %0 = vector.load %arg1[%c0, %c0_0] : memref<36x128xf32, #tpu.memory_space<vmem>>, vector<36x128xf32>
    %c0_1 = arith.constant 0 : index
    %c0_2 = arith.constant 0 : index
    %1 = vector.load %arg2[%c0_1, %c0_2] : memref<144x36xf32, #tpu.memory_space<vmem>>, vector<144x36xf32>
    %cst = arith.constant dense<0.000000e+00> : vector<144x128xf32>
    %2 = tpu.matmul %1, %0, %cst {dimension_numbers = #tpu.dot_dimension_numbers<[1], [0], [0], [1], [0, 0, 1, 1], [], []>} : vector<144x36xf32>, vector<36x128xf32>, vector<144x128xf32> -> vector<144x128xf32>
    %c0_3 = arith.constant 0 : index
    %c0_4 = arith.constant 0 : index
    %3 = vector.load %arg3[%c0_3, %c0_4] : memref<144x1xf32, #tpu.memory_space<vmem>>, vector<144x1xf32>
    %4 = vector.broadcast %3 : vector<144x1xf32> to vector<144x128xf32>
    %5 = arith.addf %2, %4 : vector<144x128xf32>
    %cst_5 = arith.constant 0.000000e+00 : f32
    %6 = vector.broadcast %cst_5 : f32 to vector<144x128xf32>
    %7 = arith.cmpf ogt, %5, %6 : vector<144x128xf32>
    %cst_6 = arith.constant 2.000000e-02 : f32
    %8 = vector.broadcast %cst_6 : f32 to vector<144x128xf32>
    %9 = arith.mulf %8, %5 : vector<144x128xf32>
    %10 = arith.select %7, %5, %9 : vector<144x128xi1>, vector<144x128xf32>
    %c0_7 = arith.constant 0 : index
    %c0_8 = arith.constant 0 : index
    %11 = vector.load %arg4[%c0_7, %c0_8] : memref<72x144xf32, #tpu.memory_space<vmem>>, vector<72x144xf32>
    %cst_9 = arith.constant dense<0.000000e+00> : vector<72x128xf32>
    %12 = tpu.matmul %11, %10, %cst_9 {dimension_numbers = #tpu.dot_dimension_numbers<[1], [0], [0], [1], [0, 0, 1, 1], [], []>} : vector<72x144xf32>, vector<144x128xf32>, vector<72x128xf32> -> vector<72x128xf32>
    %c0_10 = arith.constant 0 : index
    %c0_11 = arith.constant 0 : index
    %13 = vector.load %arg5[%c0_10, %c0_11] : memref<72x1xf32, #tpu.memory_space<vmem>>, vector<72x1xf32>
    %14 = vector.broadcast %13 : vector<72x1xf32> to vector<72x128xf32>
    %15 = arith.addf %12, %14 : vector<72x128xf32>
    %cst_12 = arith.constant 0.000000e+00 : f32
    %16 = vector.broadcast %cst_12 : f32 to vector<72x128xf32>
    %17 = arith.cmpf ogt, %15, %16 : vector<72x128xf32>
    %cst_13 = arith.constant 2.000000e-02 : f32
    %18 = vector.broadcast %cst_13 : f32 to vector<72x128xf32>
    %19 = arith.mulf %18, %15 : vector<72x128xf32>
    %20 = arith.select %17, %15, %19 : vector<72x128xi1>, vector<72x128xf32>
    %c0_14 = arith.constant 0 : index
    %c0_15 = arith.constant 0 : index
    %21 = vector.load %arg6[%c0_14, %c0_15] : memref<1x72xf32, #tpu.memory_space<vmem>>, vector<1x72xf32>
    %cst_16 = arith.constant dense<0.000000e+00> : vector<1x128xf32>
    %22 = tpu.matmul %21, %20, %cst_16 {dimension_numbers = #tpu.dot_dimension_numbers<[1], [0], [0], [1], [0, 0, 1, 1], [], []>} : vector<1x72xf32>, vector<72x128xf32>, vector<1x128xf32> -> vector<1x128xf32>
    %c0_17 = arith.constant 0 : index
    %c0_18 = arith.constant 0 : index
    %23 = vector.load %arg7[%c0_17, %c0_18] : memref<1x1xf32, #tpu.memory_space<vmem>>, vector<1x1xf32>
    %24 = vector.broadcast %23 : vector<1x1xf32> to vector<1x128xf32>
    %25 = arith.addf %22, %24 : vector<1x128xf32>
    %cst_19 = arith.constant 0.000000e+00 : f32
    %26 = vector.broadcast %cst_19 : f32 to vector<1x128xf32>
    %27 = arith.cmpf ogt, %25, %26 : vector<1x128xf32>
    %cst_20 = arith.constant 2.000000e-02 : f32
    %28 = vector.broadcast %cst_20 : f32 to vector<1x128xf32>
    %29 = arith.mulf %28, %25 : vector<1x128xf32>
    %30 = arith.select %27, %25, %29 : vector<1x128xi1>, vector<1x128xf32>
    %c0_21 = arith.constant 0 : index
    %c0_22 = arith.constant 0 : index
    %31 = vector.load %arg8[%c0_21, %c0_22] : memref<1x128xf32, #tpu.memory_space<vmem>>, vector<1x128xf32>
    tpu.vector_store %arg8[%c0_21, %c0_22], %30 {strides = array<i32>} : memref<1x128xf32, #tpu.memory_space<vmem>>, vector<1x128xf32>,
    return
  }
  func.func @transform_0(%arg0: i32) -> (i32, i32) {
    %c0_i32 = arith.constant 0 : i32
    %c0_i32_0 = arith.constant 0 : i32
    return %c0_i32, %arg0 : i32, i32
  }
  func.func @transform_1(%arg0: i32) -> (i32, i32) {
    %c0_i32 = arith.constant 0 : i32
    %c0_i32_0 = arith.constant 0 : i32
    %c0_i32_1 = arith.constant 0 : i32
    return %c0_i32, %c0_i32_0 : i32, i32
  }
  func.func @transform_2(%arg0: i32) -> (i32, i32) {
    %c0_i32 = arith.constant 0 : i32
    %c0_i32_0 = arith.constant 0 : i32
    %c0_i32_1 = arith.constant 0 : i32
    return %c0_i32, %c0_i32_0 : i32, i32
  }
  func.func @transform_3(%arg0: i32) -> (i32, i32) {
    %c0_i32 = arith.constant 0 : i32
    %c0_i32_0 = arith.constant 0 : i32
    %c0_i32_1 = arith.constant 0 : i32
    return %c0_i32, %c0_i32_0 : i32, i32
  }
  func.func @transform_4(%arg0: i32) -> (i32, i32) {
    %c0_i32 = arith.constant 0 : i32
    %c0_i32_0 = arith.constant 0 : i32
    %c0_i32_1 = arith.constant 0 : i32
    return %c0_i32, %c0_i32_0 : i32, i32
  }
  func.func @transform_5(%arg0: i32) -> (i32, i32) {
    %c0_i32 = arith.constant 0 : i32
    %c0_i32_0 = arith.constant 0 : i32
    %c0_i32_1 = arith.constant 0 : i32
    return %c0_i32, %c0_i32_0 : i32, i32
  }
  func.func @transform_6(%arg0: i32) -> (i32, i32) {
    %c0_i32 = arith.constant 0 : i32
    %c0_i32_0 = arith.constant 0 : i32
    %c0_i32_1 = arith.constant 0 : i32
    return %c0_i32, %c0_i32_0 : i32, i32
  }
  func.func @transform_7(%arg0: i32) -> (i32, i32) {
    %c0_i32 = arith.constant 0 : i32
    %c0_i32_0 = arith.constant 0 : i32
    return %c0_i32, %arg0 : i32, i32
  }
}

</mosaic_0001>

<llo_original>
// kernel: tpu_custom_call.1
$region0: #{tpu_custom_call.1}
  #allocation0 [shape = 'u32[]', space=smem, size = 0x4, offset = 0x4, fixed_abs, tag = 'smem constant byte address 0x4 - core index']
  #allocation1 [shape = 'u32[144,128]{1,0:T(1,128)}', space=vmem, size = 0x12000, scoped, tag = 'internal scratch']
  #allocation2 [shape = 'f32[1,1]{1,0:T(1,128)S(1)}', space=vmem, size = 0x200, scoped, tag = 'scoped memory for tpu_custom_call.1']
  %s0 = inlined_call_operand.vmem [shape: f32[36,128], index: 0, kind: input, shape index: {}]
  %s1 = inlined_call_operand.vmem [shape: f32[144,36], index: 1, kind: input, shape index: {}]
  %s2 = inlined_call_operand.vmem [shape: f32[144,1], index: 2, kind: input, shape index: {}]
  %s3 = inlined_call_operand.vmem [shape: f32[72,144], index: 3, kind: input, shape index: {}]
  %s4 = inlined_call_operand.vmem [shape: f32[72,1], index: 4, kind: input, shape index: {}]
  %s5 = inlined_call_operand.vmem [shape: f32[1,72], index: 5, kind: input, shape index: {}]
  %s6 = inlined_call_operand.<no memory space> [shape: f32[1,1], index: 6, kind: input, shape index: {}]
  %s7 = inlined_call_operand.hbm [shape: f32[1,128], index: 7, kind: output, shape index: {}]
  %s8 = sld [smem:[#allocation0]]
  $region38: #{tpu_custom_call.1} parent=0
    _
  %s10 = ssub.s32 1, %s8
  %s11 = scalar_select 0, %s10, %s8
  %v12 = vstv %s6
  %13 = vst [vmem:[#allocation2] sm:$0x1] %v12
  $region1: #{tpu_custom_call.1} parent=0
    #allocation3 [shape = 'u8[512]{0}', space=vmem, size = 0x400, scoped, tag = 'output window, operand 0, single buffered']
    #allocation4 [shape = 's32[1]{0}', space=sflag, size = 0x4, scoped, tag = 'scoped memory for tpu_custom_call.1']
    %14 = vsyncpa [#allocation4], 0
    // Predicated region
    $region2: #{tpu_custom_call.1} parent=1 // pred_check
      _
    $region3: #{tpu_custom_call.1} parent=1 // pred_check_branch
      %16 = sbr.rel (0) target = $region5
    $region4: #{tpu_custom_call.1} parent=1 // pred_region
      _
    $region5: #{tpu_custom_call.1} parent=1 // pred_fallthru
      _
    // Predicated region
    $region6: #{tpu_custom_call.1} parent=1 // pred_check
      _
    $region7: #{tpu_custom_call.1} parent=1 // pred_check_branch
      %18 = sbr.rel (0) target = $region9
    $region8: #{tpu_custom_call.1} parent=1 // pred_region
      _
    $region9: #{tpu_custom_call.1} parent=1 // pred_fallthru
      _
    // Predicated region
    $region10: #{tpu_custom_call.1} parent=1 // pred_check
      _
    $region11: #{tpu_custom_call.1} parent=1 // pred_check_branch
      %20 = sbr.rel (0) target = $region13
    $region12: #{tpu_custom_call.1} parent=1 // pred_region
      _
    $region13: #{tpu_custom_call.1} parent=1 // pred_fallthru
      _
    // Predicated region
    $region14: #{tpu_custom_call.1} parent=1 // pred_check
      _
    $region15: #{tpu_custom_call.1} parent=1 // pred_check_branch
      %22 = sbr.rel (0) target = $region17
    $region16: #{tpu_custom_call.1} parent=1 // pred_region
      _
    $region17: #{tpu_custom_call.1} parent=1 // pred_fallthru
      _
    // Predicated region
    $region18: #{tpu_custom_call.1} parent=1 // pred_check
      _
    $region19: #{tpu_custom_call.1} parent=1 // pred_check_branch
      %24 = sbr.rel (0) target = $region21
    $region20: #{tpu_custom_call.1} parent=1 // pred_region
      _
    $region21: #{tpu_custom_call.1} parent=1 // pred_fallthru
      _
    // Predicated region
    $region22: #{tpu_custom_call.1} parent=1 // pred_check
      _
    $region23: #{tpu_custom_call.1} parent=1 // pred_check_branch
      %26 = sbr.rel (0) target = $region25
    $region24: #{tpu_custom_call.1} parent=1 // pred_region
      _
    $region25: #{tpu_custom_call.1} parent=1 // pred_fallthru
      _
    // Predicated region
    $region26: #{tpu_custom_call.1} parent=1 // pred_check
      _
    $region27: #{tpu_custom_call.1} parent=1 // pred_check_branch
      %28 = sbr.rel (0) target = $region29
    $region28: #{tpu_custom_call.1} parent=1 // pred_region
      _
    $region29: #{tpu_custom_call.1} parent=1 // pred_fallthru
      _
    %v29 = vld [vmem:[%s0] sm:$0xff]
    %v30 = vld [vmem:[%s0 + $0x8] sm:$0xff]
    %v31 = vld [vmem:[%s0 + $0x10] sm:$0xff]
    %v32 = vld [vmem:[%s0 + $0x18] sm:$0xff]
    %v33 = vld [vmem:[%s0 + $0x20] sm:$0xf]
    %v34 = vld [vmem:[%s1] sm:$0xff]
    %v35 = vld [vmem:[%s1 + $0x8] sm:$0xff]
    %v36 = vld [vmem:[%s1 + $0x10] sm:$0xff]
    %v37 = vld [vmem:[%s1 + $0x18] sm:$0xff]
    %v38 = vld [vmem:[%s1 + $0x20] sm:$0xff]
    %v39 = vld [vmem:[%s1 + $0x28] sm:$0xff]
    %v40 = vld [vmem:[%s1 + $0x30] sm:$0xff]
    %v41 = vld [vmem:[%s1 + $0x38] sm:$0xff]
    %v42 = vld [vmem:[%s1 + $0x40] sm:$0xff]
    %v43 = vld [vmem:[%s1 + $0x48] sm:$0xff]
    %v44 = vld [vmem:[%s1 + $0x50] sm:$0xff]
    %v45 = vld [vmem:[%s1 + $0x58] sm:$0xff]
    %v46 = vld [vmem:[%s1 + $0x60] sm:$0xff]
    %v47 = vld [vmem:[%s1 + $0x68] sm:$0xff]
    %v48 = vld [vmem:[%s1 + $0x70] sm:$0xff]
    %v49 = vld [vmem:[%s1 + $0x78] sm:$0xff]
    %v50 = vld [vmem:[%s1 + $0x80] sm:$0xff]
    %v51 = vld [vmem:[%s1 + $0x88] sm:$0xff]
    %v52 = vld [vmem:[%s2] sm:$0xff]
    %v53 = vld [vmem:[%s2 + $0x8] sm:$0xff]
    %v54 = vld [vmem:[%s2 + $0x10] sm:$0xff]
    %v55 = vld [vmem:[%s2 + $0x18] sm:$0xff]
    %v56 = vld [vmem:[%s2 + $0x20] sm:$0xff]
    %v57 = vld [vmem:[%s2 + $0x28] sm:$0xff]
    %v58 = vld [vmem:[%s2 + $0x30] sm:$0xff]
    %v59 = vld [vmem:[%s2 + $0x38] sm:$0xff]
    %v60 = vld [vmem:[%s2 + $0x40] sm:$0xff]
    %v61 = vld [vmem:[%s2 + $0x48] sm:$0xff]
    %v62 = vld [vmem:[%s2 + $0x50] sm:$0xff]
    %v63 = vld [vmem:[%s2 + $0x58] sm:$0xff]
    %v64 = vld [vmem:[%s2 + $0x60] sm:$0xff]
    %v65 = vld [vmem:[%s2 + $0x68] sm:$0xff]
    %v66 = vld [vmem:[%s2 + $0x70] sm:$0xff]
    %v67 = vld [vmem:[%s2 + $0x78] sm:$0xff]
    %v68 = vld [vmem:[%s2 + $0x80] sm:$0xff]
    %v69 = vld [vmem:[%s2 + $0x88] sm:$0xff]
    %71 = vset.pattern.permute.xlu0 0
    %72 = vperm.xlu0 %71, %v52
    %v73 = vpop.permute.xlu0 %72
    %76 = vset.pattern.permute.xlu0 0
    %77 = vperm.xlu0 %76, %v53
    %v78 = vpop.permute.xlu0 %77
    %81 = vset.pattern.permute.xlu0 0
    %82 = vperm.xlu0 %81, %v54
    %v83 = vpop.permute.xlu0 %82
    %86 = vset.pattern.permute.xlu0 0
    %87 = vperm.xlu0 %86, %v55
    %v88 = vpop.permute.xlu0 %87
    %91 = vset.pattern.permute.xlu0 0
    %92 = vperm.xlu0 %91, %v56
    %v93 = vpop.permute.xlu0 %92
    %96 = vset.pattern.permute.xlu0 0
    %97 = vperm.xlu0 %96, %v57
    %v98 = vpop.permute.xlu0 %97
    %101 = vset.pattern.permute.xlu0 0
    %102 = vperm.xlu0 %101, %v58
    %v103 = vpop.permute.xlu0 %102
    %106 = vset.pattern.permute.xlu0 0
    %107 = vperm.xlu0 %106, %v59
    %v108 = vpop.permute.xlu0 %107
    %111 = vset.pattern.permute.xlu0 0
    %112 = vperm.xlu0 %111, %v60
    %v113 = vpop.permute.xlu0 %112
    %116 = vset.pattern.permute.xlu0 0
    %117 = vperm.xlu0 %116, %v61
    %v118 = vpop.permute.xlu0 %117
    %121 = vset.pattern.permute.xlu0 0
    %122 = vperm.xlu0 %121, %v62
    %v123 = vpop.permute.xlu0 %122
    %126 = vset.pattern.permute.xlu0 0
    %127 = vperm.xlu0 %126, %v63
    %v128 = vpop.permute.xlu0 %127
    %131 = vset.pattern.permute.xlu0 0
    %132 = vperm.xlu0 %131, %v64
    %v133 = vpop.permute.xlu0 %132
    %136 = vset.pattern.permute.xlu0 0
    %137 = vperm.xlu0 %136, %v65
    %v138 = vpop.permute.xlu0 %137
    %141 = vset.pattern.permute.xlu0 0
    %142 = vperm.xlu0 %141, %v66
    %v143 = vpop.permute.xlu0 %142
    %146 = vset.pattern.permute.xlu0 0
    %147 = vperm.xlu0 %146, %v67
    %v148 = vpop.permute.xlu0 %147
    %151 = vset.pattern.permute.xlu0 0
    %152 = vperm.xlu0 %151, %v68
    %v153 = vpop.permute.xlu0 %152
    %156 = vset.pattern.permute.xlu0 0
    %157 = vperm.xlu0 %156, %v69
    %v158 = vpop.permute.xlu0 %157
    %vm160 = vcmask 293888
    %v162 = vsel %vm160, %v34, 0
    %v165 = vsel %vm160, %v35, 0
    %v168 = vsel %vm160, %v36, 0
    %v171 = vsel %vm160, %v37, 0
    %v174 = vsel %vm160, %v38, 0
    %v177 = vsel %vm160, %v39, 0
    %v180 = vsel %vm160, %v40, 0
    %v183 = vsel %vm160, %v41, 0
    %v186 = vsel %vm160, %v42, 0
    %v189 = vsel %vm160, %v43, 0
    %v192 = vsel %vm160, %v44, 0
    %v195 = vsel %vm160, %v45, 0
    %v198 = vsel %vm160, %v46, 0
    %v201 = vsel %vm160, %v47, 0
    %v204 = vsel %vm160, %v48, 0
    %v207 = vsel %vm160, %v49, 0
    %v210 = vsel %vm160, %v50, 0
    %v213 = vsel %vm160, %v51, 0
    %vm215 = vcmask 1043456
    %v217 = vsel %vm215, %v33, 0
    %219 = vmatprep.subr.mxu0 0.0
    %220 = vmatpush1.msra.mxu0 0.0
    %221 = vmatprep.subr.mxu0 0.0
    %222 = vmatpush1.msra.mxu0 0.0
    %223 = vmatprep.subr.mxu0 0.0
    %224 = vmatpush1.msra.mxu0 0.0
    %225 = vmatprep.subr.mxu0 0.0
    %226 = vmatpush1.msra.mxu0 0.0
    %227 = vmatprep.subr.mxu0 0.0
    %228 = vmatpush1.msra.mxu0 0.0
    %229 = vmatprep.subr.mxu0 0.0
    %230 = vmatpush1.msra.mxu0 0.0
    %231 = vmatprep.subr.mxu0 0.0
    %232 = vmatpush1.msra.mxu0 0.0
    %233 = vmatprep.subr.mxu0 0.0
    %234 = vmatpush1.msra.mxu0 0.0
    %235 = vmatprep.subr.mxu0 0.0
    %236 = vmatpush1.msra.mxu0 0.0
    %237 = vmatprep.subr.mxu0 0.0
    %238 = vmatpush1.msra.mxu0 0.0
    %239 = vmatprep.subr.mxu0 0.0
    %240 = vmatpush1.msra.mxu0 0.0
    %241 = vmatprep.subr.mxu0 0.0
    %242 = vmatpush1.msra.mxu0 %v217
    %243 = vmatprep.subr.mxu0 0.0
    %244 = vmatpush1.msra.mxu0 %v32
    %245 = vmatprep.subr.mxu0 0.0
    %246 = vmatpush1.msra.mxu0 %v31
    %247 = vmatprep.subr.mxu0 0.0
    %248 = vmatpush1.msra.mxu0 %v30
    %249 = vmatprep.subr.mxu0 0.0
    %250 = vmatpush1.msra.mxu0 %v29
    %251 = vmatprep.subr.mxu0 0.0
    %252 = vmatpush2.msra.mxu0 0.0
    %253 = vmatprep.subr.mxu0 0.0
    %254 = vmatpush2.msra.mxu0 0.0
    %255 = vmatprep.subr.mxu0 0.0
    %256 = vmatpush2.msra.mxu0 0.0
    %257 = vmatprep.subr.mxu0 0.0
    %258 = vmatpush2.msra.mxu0 0.0
    %259 = vmatprep.subr.mxu0 0.0
    %260 = vmatpush2.msra.mxu0 0.0
    %261 = vmatprep.subr.mxu0 0.0
    %262 = vmatpush2.msra.mxu0 0.0
    %263 = vmatprep.subr.mxu0 0.0
    %264 = vmatpush2.msra.mxu0 0.0
    %265 = vmatprep.subr.mxu0 0.0
    %266 = vmatpush2.msra.mxu0 0.0
    %267 = vmatprep.subr.mxu0 0.0
    %268 = vmatpush2.msra.mxu0 0.0
    %269 = vmatprep.subr.mxu0 0.0
    %270 = vmatpush2.msra.mxu0 0.0
    %271 = vmatprep.subr.mxu0 0.0
    %272 = vmatpush2.msra.mxu0 0.0
    %273 = vmatprep.subr.mxu0 0.0
    %274 = vmatpush2.msra.mxu0 0.0
    %275 = vmatprep.subr.mxu0 0.0
    %276 = vmatpush2.msra.mxu0 0.0
    %277 = vmatprep.subr.mxu0 0.0
    %278 = vmatpush2.msra.mxu0 0.0
    %279 = vmatprep.subr.mxu0 0.0
    %280 = vmatpush2.msra.mxu0 0.0
    %281 = vmatprep.subr.mxu0 0.0
    %282 = vmatpush2.msra.mxu0 0.0
    %283 = vmatprep.mubr.f32.mxu0 0.0
    %284 = vmatmul.mubr.f32.gmra.mxu0 %v162
    %v285 = vpop.f32.mrf.mxu0
    %v286 = vadd.f32 %v73, %v285
    %v287 = vpop.f32.mrf.mxu0
    %288 = vmatprep.mubr.f32.mxu0 0.0
    %289 = vmatmul.mubr.f32.gmra.mxu0 %v165
    %v290 = vpop.f32.mrf.mxu0
    %v291 = vadd.f32 %v78, %v290
    %v292 = vpop.f32.mrf.mxu0
    %293 = vmatprep.mubr.f32.mxu0 0.0
    %294 = vmatmul.mubr.f32.gmra.mxu0 %v168
    %v295 = vpop.f32.mrf.mxu0
    %v296 = vadd.f32 %v83, %v295
    %v297 = vpop.f32.mrf.mxu0
    %298 = vmatprep.mubr.f32.mxu0 0.0
    %299 = vmatmul.mubr.f32.gmra.mxu0 %v171
    %v300 = vpop.f32.mrf.mxu0
    %v301 = vadd.f32 %v88, %v300
    %v302 = vpop.f32.mrf.mxu0
    %303 = vmatprep.mubr.f32.mxu0 0.0
    %304 = vmatmul.mubr.f32.gmra.mxu0 %v174
    %v305 = vpop.f32.mrf.mxu0
    %v306 = vadd.f32 %v93, %v305
    %v307 = vpop.f32.mrf.mxu0
    %308 = vmatprep.mubr.f32.mxu0 0.0
    %309 = vmatmul.mubr.f32.gmra.mxu0 %v177
    %v310 = vpop.f32.mrf.mxu0
    %v311 = vadd.f32 %v98, %v310
    %v312 = vpop.f32.mrf.mxu0
    %313 = vmatprep.mubr.f32.mxu0 0.0
    %314 = vmatmul.mubr.f32.gmra.mxu0 %v180
    %v315 = vpop.f32.mrf.mxu0
    %v316 = vadd.f32 %v103, %v315
    %v317 = vpop.f32.mrf.mxu0
    %318 = vmatprep.mubr.f32.mxu0 0.0
    %319 = vmatmul.mubr.f32.gmra.mxu0 %v183
    %v320 = vpop.f32.mrf.mxu0
    %v321 = vadd.f32 %v108, %v320
    %v322 = vpop.f32.mrf.mxu0
    %323 = vmatprep.mubr.f32.mxu0 0.0
    %324 = vmatmul.mubr.f32.gmra.mxu0 %v186
    %v325 = vpop.f32.mrf.mxu0
    %v326 = vadd.f32 %v113, %v325
    %v327 = vpop.f32.mrf.mxu0
    %328 = vmatprep.mubr.f32.mxu0 0.0
    %329 = vmatmul.mubr.f32.gmra.mxu0 %v189
    %v330 = vpop.f32.mrf.mxu0
    %v331 = vadd.f32 %v118, %v330
    %v332 = vpop.f32.mrf.mxu0
    %333 = vmatprep.mubr.f32.mxu0 0.0
    %334 = vmatmul.mubr.f32.gmra.mxu0 %v192
    %v335 = vpop.f32.mrf.mxu0
    %v336 = vadd.f32 %v123, %v335
    %v337 = vpop.f32.mrf.mxu0
    %338 = vmatprep.mubr.f32.mxu0 0.0
    %339 = vmatmul.mubr.f32.gmra.mxu0 %v195
    %v340 = vpop.f32.mrf.mxu0
    %v341 = vadd.f32 %v128, %v340
    %v342 = vpop.f32.mrf.mxu0
    %343 = vmatprep.mubr.f32.mxu0 0.0
    %344 = vmatmul.mubr.f32.gmra.mxu0 %v198
    %v345 = vpop.f32.mrf.mxu0
    %v346 = vadd.f32 %v133, %v345
    %v347 = vpop.f32.mrf.mxu0
    %348 = vmatprep.mubr.f32.mxu0 0.0
    %349 = vmatmul.mubr.f32.gmra.mxu0 %v201
    %v350 = vpop.f32.mrf.mxu0
    %v351 = vadd.f32 %v138, %v350
    %v352 = vpop.f32.mrf.mxu0
    %353 = vmatprep.mubr.f32.mxu0 0.0
    %354 = vmatmul.mubr.f32.gmra.mxu0 %v204
    %v355 = vpop.f32.mrf.mxu0
    %v356 = vadd.f32 %v143, %v355
    %v357 = vpop.f32.mrf.mxu0
    %358 = vmatprep.mubr.f32.mxu0 0.0
    %359 = vmatmul.mubr.f32.gmra.mxu0 %v207
    %v360 = vpop.f32.mrf.mxu0
    %v361 = vadd.f32 %v148, %v360
    %v362 = vpop.f32.mrf.mxu0
    %363 = vmatprep.mubr.f32.mxu0 0.0
    %364 = vmatmul.mubr.f32.gmra.mxu0 %v210
    %v365 = vpop.f32.mrf.mxu0
    %v366 = vadd.f32 %v153, %v365
    %v367 = vpop.f32.mrf.mxu0
    %368 = vmatprep.mubr.f32.mxu0 0.0
    %369 = vmatmul.mubr.f32.gmra.mxu0 %v213
    %v370 = vpop.f32.mrf.mxu0
    %v371 = vadd.f32 %v158, %v370
    %v372 = vpop.f32.mrf.mxu0
    %373 = vdwg.mxu0
    %vm374 = vcmp.gt.f32.partialorder %v286, 0.0
    %vm375 = vcmp.gt.f32.partialorder %v291, 0.0
    %vm376 = vcmp.gt.f32.partialorder %v296, 0.0
    %vm377 = vcmp.gt.f32.partialorder %v301, 0.0
    %vm378 = vcmp.gt.f32.partialorder %v306, 0.0
    %vm379 = vcmp.gt.f32.partialorder %v311, 0.0
    %vm380 = vcmp.gt.f32.partialorder %v316, 0.0
    %vm381 = vcmp.gt.f32.partialorder %v321, 0.0
    %vm382 = vcmp.gt.f32.partialorder %v326, 0.0
    %vm383 = vcmp.gt.f32.partialorder %v331, 0.0
    %vm384 = vcmp.gt.f32.partialorder %v336, 0.0
    %vm385 = vcmp.gt.f32.partialorder %v341, 0.0
    %vm386 = vcmp.gt.f32.partialorder %v346, 0.0
    %vm387 = vcmp.gt.f32.partialorder %v351, 0.0
    %vm388 = vcmp.gt.f32.partialorder %v356, 0.0
    %vm389 = vcmp.gt.f32.partialorder %v361, 0.0
    %vm390 = vcmp.gt.f32.partialorder %v366, 0.0
    %vm391 = vcmp.gt.f32.partialorder %v371, 0.0
    %v392 = vmul.f32 %v286, 0.02
    %v393 = vmul.f32 %v291, 0.02
    %v394 = vmul.f32 %v296, 0.02
    %v395 = vmul.f32 %v301, 0.02
    %v396 = vmul.f32 %v306, 0.02
    %v397 = vmul.f32 %v311, 0.02
    %v398 = vmul.f32 %v316, 0.02
    %v399 = vmul.f32 %v321, 0.02
    %v400 = vmul.f32 %v326, 0.02
    %v401 = vmul.f32 %v331, 0.02
    %v402 = vmul.f32 %v336, 0.02
    %v403 = vmul.f32 %v341, 0.02
    %v404 = vmul.f32 %v346, 0.02
    %v405 = vmul.f32 %v351, 0.02
    %v406 = vmul.f32 %v356, 0.02
    %v407 = vmul.f32 %v361, 0.02
    %v408 = vmul.f32 %v366, 0.02
    %v409 = vmul.f32 %v371, 0.02
    %v410 = vsel %vm374, %v286, %v392
    %v411 = vsel %vm375, %v291, %v393
    %v412 = vsel %vm376, %v296, %v394
    %v413 = vsel %vm377, %v301, %v395
    %v414 = vsel %vm378, %v306, %v396
    %v415 = vsel %vm379, %v311, %v397
    %v416 = vsel %vm380, %v316, %v398
    %v417 = vsel %vm381, %v321, %v399
    %v418 = vsel %vm382, %v326, %v400
    %v419 = vsel %vm383, %v331, %v401
    %v420 = vsel %vm384, %v336, %v402
    %v421 = vsel %vm385, %v341, %v403
    %v422 = vsel %vm386, %v346, %v404
    %v423 = vsel %vm387, %v351, %v405
    %v424 = vsel %vm388, %v356, %v406
    %v425 = vsel %vm389, %v361, %v407
    %v426 = vsel %vm390, %v366, %v408
    %v427 = vsel %vm391, %v371, %v409
    %v428 = vld [vmem:[%s3] sm:$0xff]
    %v429 = vld [vmem:[%s3 + $0x8] sm:$0xff]
    %v430 = vld [vmem:[%s3 + $0x10] sm:$0xff]
    %v431 = vld [vmem:[%s3 + $0x18] sm:$0xff]
    %v432 = vld [vmem:[%s3 + $0x20] sm:$0xff]
    %v433 = vld [vmem:[%s3 + $0x28] sm:$0xff]
    %v434 = vld [vmem:[%s3 + $0x30] sm:$0xff]
    %v435 = vld [vmem:[%s3 + $0x38] sm:$0xff]
    %v436 = vld [vmem:[%s3 + $0x40] sm:$0xff]
    %v437 = vld [vmem:[%s3 + $0x48] sm:$0xff]
    %v438 = vld [vmem:[%s3 + $0x50] sm:$0xff]
    %v439 = vld [vmem:[%s3 + $0x58] sm:$0xff]
    %v440 = vld [vmem:[%s3 + $0x60] sm:$0xff]
    %v441 = vld [vmem:[%s3 + $0x68] sm:$0xff]
    %v442 = vld [vmem:[%s3 + $0x70] sm:$0xff]
    %v443 = vld [vmem:[%s3 + $0x78] sm:$0xff]
    %v444 = vld [vmem:[%s3 + $0x80] sm:$0xff]
    %v445 = vld [vmem:[%s3 + $0x88] sm:$0xff]
    %v446 = vld [vmem:[%s4] sm:$0xff]
    %v447 = vld [vmem:[%s4 + $0x8] sm:$0xff]
    %v448 = vld [vmem:[%s4 + $0x10] sm:$0xff]
    %v449 = vld [vmem:[%s4 + $0x18] sm:$0xff]
    %v450 = vld [vmem:[%s4 + $0x20] sm:$0xff]
    %v451 = vld [vmem:[%s4 + $0x28] sm:$0xff]
    %v452 = vld [vmem:[%s4 + $0x30] sm:$0xff]
    %v453 = vld [vmem:[%s4 + $0x38] sm:$0xff]
    %v454 = vld [vmem:[%s4 + $0x40] sm:$0xff]
    %456 = vset.pattern.permute.xlu0 0
    %457 = vperm.xlu0 %456, %v446
    %v458 = vpop.permute.xlu0 %457
    %461 = vset.pattern.permute.xlu0 0
    %462 = vperm.xlu0 %461, %v447
    %v463 = vpop.permute.xlu0 %462
    %466 = vset.pattern.permute.xlu0 0
    %467 = vperm.xlu0 %466, %v448
    %v468 = vpop.permute.xlu0 %467
    %471 = vset.pattern.permute.xlu0 0
    %472 = vperm.xlu0 %471, %v449
    %v473 = vpop.permute.xlu0 %472
    %476 = vset.pattern.permute.xlu0 0
    %477 = vperm.xlu0 %476, %v450
    %v478 = vpop.permute.xlu0 %477
    %481 = vset.pattern.permute.xlu0 0
    %482 = vperm.xlu0 %481, %v451
    %v483 = vpop.permute.xlu0 %482
    %486 = vset.pattern.permute.xlu0 0
    %487 = vperm.xlu0 %486, %v452
    %v488 = vpop.permute.xlu0 %487
    %491 = vset.pattern.permute.xlu0 0
    %492 = vperm.xlu0 %491, %v453
    %v493 = vpop.permute.xlu0 %492
    %496 = vset.pattern.permute.xlu0 0
    %497 = vperm.xlu0 %496, %v454
    %v498 = vpop.permute.xlu0 %497
    %vm500 = vcmask 130048
    %v502 = vsel %vm500, %v429, 0
    %v505 = vsel %vm500, %v431, 0
    %v508 = vsel %vm500, %v433, 0
    %v511 = vsel %vm500, %v435, 0
    %v514 = vsel %vm500, %v437, 0
    %v517 = vsel %vm500, %v439, 0
    %v520 = vsel %vm500, %v441, 0
    %v523 = vsel %vm500, %v443, 0
    %v526 = vsel %vm500, %v445, 0
    %528 = vmatprep.subr.mxu0 0.0
    %529 = vmatpush1.msra.mxu0 %v425
    %530 = vmatprep.subr.mxu0 0.0
    %531 = vmatpush1.msra.mxu0 %v424
    %532 = vmatprep.subr.mxu0 0.0
    %533 = vmatpush1.msra.mxu0 %v423
    %534 = vmatprep.subr.mxu0 0.0
    %535 = vmatpush1.msra.mxu0 %v422
    %536 = vmatprep.subr.mxu0 0.0
    %537 = vmatpush1.msra.mxu0 %v421
    %538 = vmatprep.subr.mxu0 0.0
    %539 = vmatpush1.msra.mxu0 %v420
    %540 = vmatprep.subr.mxu0 0.0
    %541 = vmatpush1.msra.mxu0 %v419
    %542 = vmatprep.subr.mxu0 0.0
    %543 = vmatpush1.msra.mxu0 %v418
    %544 = vmatprep.subr.mxu0 0.0
    %545 = vmatpush1.msra.mxu0 %v417
    %546 = vmatprep.subr.mxu0 0.0
    %547 = vmatpush1.msra.mxu0 %v416
    %548 = vmatprep.subr.mxu0 0.0
    %549 = vmatpush1.msra.mxu0 %v415
    %550 = vmatprep.subr.mxu0 0.0
    %551 = vmatpush1.msra.mxu0 %v414
    %552 = vmatprep.subr.mxu0 0.0
    %553 = vmatpush1.msra.mxu0 %v413
    %554 = vmatprep.subr.mxu0 0.0
    %555 = vmatpush1.msra.mxu0 %v412
    %556 = vmatprep.subr.mxu0 0.0
    %557 = vmatpush1.msra.mxu0 %v411
    %558 = vmatprep.subr.mxu0 0.0
    %559 = vmatpush1.msra.mxu0 %v410
    %560 = vmatprep.subr.mxu0 0.0
    %561 = vmatpush2.msra.mxu0 0.0
    %562 = vmatprep.subr.mxu0 0.0
    %563 = vmatpush2.msra.mxu0 0.0
    %564 = vmatprep.subr.mxu0 0.0
    %565 = vmatpush2.msra.mxu0 0.0
    %566 = vmatprep.subr.mxu0 0.0
    %567 = vmatpush2.msra.mxu0 0.0
    %568 = vmatprep.subr.mxu0 0.0
    %569 = vmatpush2.msra.mxu0 0.0
    %570 = vmatprep.subr.mxu0 0.0
    %571 = vmatpush2.msra.mxu0 0.0
    %572 = vmatprep.subr.mxu0 0.0
    %573 = vmatpush2.msra.mxu0 0.0
    %574 = vmatprep.subr.mxu0 0.0
    %575 = vmatpush2.msra.mxu0 0.0
    %576 = vmatprep.subr.mxu0 0.0
    %577 = vmatpush2.msra.mxu0 0.0
    %578 = vmatprep.subr.mxu0 0.0
    %579 = vmatpush2.msra.mxu0 0.0
    %580 = vmatprep.subr.mxu0 0.0
    %581 = vmatpush2.msra.mxu0 0.0
    %582 = vmatprep.subr.mxu0 0.0
    %583 = vmatpush2.msra.mxu0 0.0
    %584 = vmatprep.subr.mxu0 0.0
    %585 = vmatpush2.msra.mxu0 0.0
    %586 = vmatprep.subr.mxu0 0.0
    %587 = vmatpush2.msra.mxu0 0.0
    %588 = vmatprep.subr.mxu0 0.0
    %589 = vmatpush2.msra.mxu0 %v427
    %590 = vmatprep.subr.mxu0 0.0
    %591 = vmatpush2.msra.mxu0 %v426
    %592 = vmatprep.mubr.f32.mxu0 %v502
    %593 = vmatmul.mubr.f32.gmra.mxu0 %v428
    %v594 = vpop.f32.mrf.mxu0
    %v595 = vadd.f32 %v458, %v594
    %v596 = vpop.f32.mrf.mxu0
    %597 = vmatprep.mubr.f32.mxu0 %v505
    %598 = vmatmul.mubr.f32.gmra.mxu0 %v430
    %v599 = vpop.f32.mrf.mxu0
    %v600 = vadd.f32 %v463, %v599
    %v601 = vpop.f32.mrf.mxu0
    %602 = vmatprep.mubr.f32.mxu0 %v508
    %603 = vmatmul.mubr.f32.gmra.mxu0 %v432
    %v604 = vpop.f32.mrf.mxu0
    %v605 = vadd.f32 %v468, %v604
    %v606 = vpop.f32.mrf.mxu0
    %607 = vmatprep.mubr.f32.mxu0 %v511
    %608 = vmatmul.mubr.f32.gmra.mxu0 %v434
    %v609 = vpop.f32.mrf.mxu0
    %v610 = vadd.f32 %v473, %v609
    %v611 = vpop.f32.mrf.mxu0
    %612 = vmatprep.mubr.f32.mxu0 %v514
    %613 = vmatmul.mubr.f32.gmra.mxu0 %v436
    %v614 = vpop.f32.mrf.mxu0
    %v615 = vadd.f32 %v478, %v614
    %v616 = vpop.f32.mrf.mxu0
    %617 = vmatprep.mubr.f32.mxu0 %v517
    %618 = vmatmul.mubr.f32.gmra.mxu0 %v438
    %v619 = vpop.f32.mrf.mxu0
    %v620 = vadd.f32 %v483, %v619
    %v621 = vpop.f32.mrf.mxu0
    %622 = vmatprep.mubr.f32.mxu0 %v520
    %623 = vmatmul.mubr.f32.gmra.mxu0 %v440
    %v624 = vpop.f32.mrf.mxu0
    %v625 = vadd.f32 %v488, %v624
    %v626 = vpop.f32.mrf.mxu0
    %627 = vmatprep.mubr.f32.mxu0 %v523
    %628 = vmatmul.mubr.f32.gmra.mxu0 %v442
    %v629 = vpop.f32.mrf.mxu0
    %v630 = vadd.f32 %v493, %v629
    %v631 = vpop.f32.mrf.mxu0
    %632 = vmatprep.mubr.f32.mxu0 %v526
    %633 = vmatmul.mubr.f32.gmra.mxu0 %v444
    %v634 = vpop.f32.mrf.mxu0
    %v635 = vadd.f32 %v498, %v634
    %v636 = vpop.f32.mrf.mxu0
    %637 = vdwg.mxu0
    %vm638 = vcmp.gt.f32.partialorder %v595, 0.0
    %vm639 = vcmp.gt.f32.partialorder %v600, 0.0
    %vm640 = vcmp.gt.f32.partialorder %v605, 0.0
    %vm641 = vcmp.gt.f32.partialorder %v610, 0.0
    %vm642 = vcmp.gt.f32.partialorder %v615, 0.0
    %vm643 = vcmp.gt.f32.partialorder %v620, 0.0
    %vm644 = vcmp.gt.f32.partialorder %v625, 0.0
    %vm645 = vcmp.gt.f32.partialorder %v630, 0.0
    %vm646 = vcmp.gt.f32.partialorder %v635, 0.0
    %v647 = vmul.f32 %v595, 0.02
    %v648 = vmul.f32 %v600, 0.02
    %v649 = vmul.f32 %v605, 0.02
    %v650 = vmul.f32 %v610, 0.02
    %v651 = vmul.f32 %v615, 0.02
    %v652 = vmul.f32 %v620, 0.02
    %v653 = vmul.f32 %v625, 0.02
    %v654 = vmul.f32 %v630, 0.02
    %v655 = vmul.f32 %v635, 0.02
    %v656 = vsel %vm638, %v595, %v647
    %v657 = vsel %vm639, %v600, %v648
    %v658 = vsel %vm640, %v605, %v649
    %v659 = vsel %vm641, %v610, %v650
    %v660 = vsel %vm642, %v615, %v651
    %v661 = vsel %vm643, %v620, %v652
    %v662 = vsel %vm644, %v625, %v653
    %v663 = vsel %vm645, %v630, %v654
    %v664 = vsel %vm646, %v635, %v655
    %v665 = vld [vmem:[%s5] sm:$0x1]
    %v666 = vld [vmem:[#allocation2] sm:$0x1]
    %668 = vset.pattern.permute.xlu0 0
    %669 = vperm.xlu0 %668, %v666
    %v670 = vpop.permute.xlu0 %669
    %v672 = vlaneseq
    %v673 = vshrl.u32 %v672, 7
    %v674 = vsub.s32 0, %v673
    %v675 = vrot.slane %v670, %v674
    %vm676 = vcmask 588800
    %v678 = vsel %vm676, %v665, 0
    %680 = vmatprep.subr.mxu0 0.0
    %681 = vmatpush1.msra.mxu0 0.0
    %682 = vmatprep.subr.mxu0 0.0
    %683 = vmatpush1.msra.mxu0 0.0
    %684 = vmatprep.subr.mxu0 0.0
    %685 = vmatpush1.msra.mxu0 0.0
    %686 = vmatprep.subr.mxu0 0.0
    %687 = vmatpush1.msra.mxu0 0.0
    %688 = vmatprep.subr.mxu0 0.0
    %689 = vmatpush1.msra.mxu0 0.0
    %690 = vmatprep.subr.mxu0 0.0
    %691 = vmatpush1.msra.mxu0 0.0
    %692 = vmatprep.subr.mxu0 0.0
    %693 = vmatpush1.msra.mxu0 0.0
    %694 = vmatprep.subr.mxu0 0.0
    %695 = vmatpush1.msra.mxu0 %v664
    %696 = vmatprep.subr.mxu0 0.0
    %697 = vmatpush1.msra.mxu0 %v663
    %698 = vmatprep.subr.mxu0 0.0
    %699 = vmatpush1.msra.mxu0 %v662
    %700 = vmatprep.subr.mxu0 0.0
    %701 = vmatpush1.msra.mxu0 %v661
    %702 = vmatprep.subr.mxu0 0.0
    %703 = vmatpush1.msra.mxu0 %v660
    %704 = vmatprep.subr.mxu0 0.0
    %705 = vmatpush1.msra.mxu0 %v659
    %706 = vmatprep.subr.mxu0 0.0
    %707 = vmatpush1.msra.mxu0 %v658
    %708 = vmatprep.subr.mxu0 0.0
    %709 = vmatpush1.msra.mxu0 %v657
    %710 = vmatprep.subr.mxu0 0.0
    %711 = vmatpush1.msra.mxu0 %v656
    %712 = vmatprep.subr.mxu0 0.0
    %713 = vmatpush2.msra.mxu0 0.0
    %714 = vmatprep.subr.mxu0 0.0
    %715 = vmatpush2.msra.mxu0 0.0
    %716 = vmatprep.subr.mxu0 0.0
    %717 = vmatpush2.msra.mxu0 0.0
    %718 = vmatprep.subr.mxu0 0.0
    %719 = vmatpush2.msra.mxu0 0.0
    %720 = vmatprep.subr.mxu0 0.0
    %721 = vmatpush2.msra.mxu0 0.0
    %722 = vmatprep.subr.mxu0 0.0
    %723 = vmatpush2.msra.mxu0 0.0
    %724 = vmatprep.subr.mxu0 0.0
    %725 = vmatpush2.msra.mxu0 0.0
    %726 = vmatprep.subr.mxu0 0.0
    %727 = vmatpush2.msra.mxu0 0.0
    %728 = vmatprep.subr.mxu0 0.0
    %729 = vmatpush2.msra.mxu0 0.0
    %730 = vmatprep.subr.mxu0 0.0
    %731 = vmatpush2.msra.mxu0 0.0
    %732 = vmatprep.subr.mxu0 0.0
    %733 = vmatpush2.msra.mxu0 0.0
    %734 = vmatprep.subr.mxu0 0.0
    %735 = vmatpush2.msra.mxu0 0.0
    %736 = vmatprep.subr.mxu0 0.0
    %737 = vmatpush2.msra.mxu0 0.0
    %738 = vmatprep.subr.mxu0 0.0
    %739 = vmatpush2.msra.mxu0 0.0
    %740 = vmatprep.subr.mxu0 0.0
    %741 = vmatpush2.msra.mxu0 0.0
    %742 = vmatprep.subr.mxu0 0.0
    %743 = vmatpush2.msra.mxu0 0.0
    %744 = vmatprep.mubr.f32.mxu0 0.0
    %745 = vmatmul.mubr.f32.gmra.mxu0 %v678
    %v746 = vpop.f32.mrf.mxu0
    %v747 = vadd.f32 %v675, %v746
    %v748 = vpop.f32.mrf.mxu0
    %749 = vdwg.mxu0
    %vm750 = vcmp.gt.f32.partialorder %v747, 0.0
    %v751 = vmul.f32 %v747, 0.02
    %v752 = vsel %vm750, %v747, %v751
    %753 = vst [vmem:[#allocation3] sm:$0x1] %v752
    // Predicated region
    $region30: #{tpu_custom_call.1} parent=1 // pred_check
      _
    $region31: #{tpu_custom_call.1} parent=1 // pred_check_branch
      %755 = sbr.rel (0) target = $region33
    $region32: #{tpu_custom_call.1} parent=1 // pred_region
      %s757 = ssub.s32 16, 16
      %758 = vsyncadd [#allocation4], %s757
      %s760 = sshll.u32 [#allocation3], 4
      %s761 = int_to_ptr.vmem [resolvable:$true] %s760
      %763 = dma.vmem_to_hbm [thread:$0]  %s761, 16, %s7, [#allocation4]
    $region33: #{tpu_custom_call.1} parent=1 // pred_fallthru
      _
    // Predicated region
    $region34: #{tpu_custom_call.1} parent=1 // pred_check
      _
    $region35: #{tpu_custom_call.1} parent=1 // pred_check_branch
      %765 = sbr.rel (0) target = $region37
    $region36: #{tpu_custom_call.1} parent=1 // pred_region
      %766 = dma.done [#allocation4], 16
    $region37: #{tpu_custom_call.1} parent=1 // pred_fallthru
      _
    %767 = vsyncpa [#allocation4], 1

</llo_original>
